<compile_context>
chip_gen: v5e
topology: v5e:2x2
jax: 0.10.0
libtpu: 0.0.40
codegen_flags: <defaults>
</compile_context>

<pallas_src>
import functools

import jax
import jax.numpy as jnp
from jax import lax
from jax.experimental import pallas as pl
from jax.experimental.pallas import tpu as pltpu


def transformer_block_kernel(
    x_ref, sp_ref, b1_ref, wqkv_ref, wp_ref, w1_ref, w2_ref,
    o_ref, cat_ref, *, head_nb, head_size, approx_recip):
  """One grid step == one batch element.

  x_ref    : (1, T, C) f32   activations for this batch element
  sp_ref   : (6, C)    f32   packed [ln1g; ln1b; proj_bias; ln2g; ln2b; ffn_b2]
  b1_ref   : (1, 4C)   f32   FFN first bias
  wqkv_ref : (C, 3C)   bf16  [Wq*scale | Wk | Wv] (per-head column blocks)
  wp_ref   : (C, C)    bf16  output projection
  w1_ref   : (C, 4C)   bf16, w2_ref : (4C, C) bf16
  o_ref    : (1, T, C) f32   output
  cat_ref  : (T, C)    f32   VMEM scratch for concatenated head outputs
  """
  f32 = jnp.float32
  bf16 = jnp.bfloat16

  x = x_ref[0].astype(f32)                                 # (T, C)
  T, C = x.shape
  hs = head_size

  ln1g = sp_ref[0:1, :]
  ln1b = sp_ref[1:2, :]
  bp = sp_ref[2:3, :]
  ln2g = sp_ref[3:4, :]
  ln2b = sp_ref[4:5, :]
  b2 = sp_ref[5:6, :]

  def layer_norm(v, g, b, eps=1e-5):
    mu = jnp.mean(v, axis=-1, keepdims=True)
    vc = v - mu
    var = jnp.mean(vc * vc, axis=-1, keepdims=True)
    return vc * lax.rsqrt(var + eps) * g + b

  # ---- LN1 + fused QKV projection (one wide bf16 MXU matmul) ----
  y = layer_norm(x, ln1g, ln1b)
  qkv = jnp.dot(y.astype(bf16), wqkv_ref[...],
                preferred_element_type=f32)                # (T, 3C)

  # ---- causal mask, generated in-kernel, additive, hoisted out of the loop ----
  row = lax.broadcasted_iota(jnp.int32, (T, T), 0)
  col = lax.broadcasted_iota(jnp.int32, (T, T), 1)
  neg_add = jnp.where(row >= col, f32(0.0), f32(-1e30))    # (T, T)

  # ---- per-head attention; head outputs land in columns of cat_ref ----
  for h in range(head_nb):                                 # static & small
    q = qkv[:, h * hs:(h + 1) * hs]                        # scale already folded
    k = qkv[:, C + h * hs:C + (h + 1) * hs]
    v = qkv[:, 2 * C + h * hs:2 * C + (h + 1) * hs]

    s = lax.dot_general(q.astype(bf16), k.astype(bf16),
                        (((1,), (1,)), ((), ())),
                        preferred_element_type=f32)        # (T, T)
    s = s + neg_add                                        # mask BEFORE exp
    m = jnp.max(s, axis=-1, keepdims=True)
    p = jnp.exp(s - m)                                     # <= 1, NaN-safe
    denom = jnp.sum(p, axis=-1, keepdims=True)
    if approx_recip:
      p = p * pl.reciprocal(denom, approx=True)            # EUP slot
    else:
      p = p / denom

    head_out = jnp.dot(p.astype(bf16), v.astype(bf16),
                       preferred_element_type=f32)         # (T, hs)
    cat_ref[:, h * hs:(h + 1) * hs] = head_out             # no concat / no K=hs GEMM

  # ---- ONE output-projection GEMM over all heads ----
  mha = jnp.dot(cat_ref[...].astype(bf16), wp_ref[...],
                preferred_element_type=f32) + bp           # (T, C)
  r1 = mha + x

  # ---- LN2 + FFN (Linear -> ReLU -> Linear), residual with ORIGINAL x ----
  z = layer_norm(r1, ln2g, ln2b)
  h1 = jnp.dot(z.astype(bf16), w1_ref[...], preferred_element_type=f32)
  h1 = jnp.maximum(h1 + b1_ref[...].astype(f32), 0.0)      # (T, 4C)
  ffn = jnp.dot(h1.astype(bf16), w2_ref[...], preferred_element_type=f32) + b2

  o_ref[0] = (ffn + x).astype(o_ref.dtype)                 # matches PyTorch: + x


def transformer_block(x, wq, wk, wv, wp, bp, ln1g, ln1b, ln2g, ln2b,
                      w1, b1, w2, b2, *, head_nb, approx_recip=True):
  """x: (B,T,C) f32. Per-head wq/wk/wv: (H,C,hs) (in,out). wp: (C,C). Rest biases/LN."""
  B, T, C = x.shape
  H, _, hs = wq.shape
  assert H == head_nb and H * hs == C

  # ---- one-time parameter packing (would live at model-construction time) ----
  scale = jnp.float32(hs) ** -0.5

  def flat(w):   # (H, C, hs) -> (C, H*hs); column block h == w[h]
    return jnp.transpose(w, (1, 0, 2)).reshape(C, H * hs)

  wqkv = jnp.concatenate([flat(wq) * scale, flat(wk), flat(wv)],
                         axis=1).astype(jnp.bfloat16)       # (C, 3C)
  wp_bf = wp.astype(jnp.bfloat16)
  w1_bf = w1.astype(jnp.bfloat16)
  w2_bf = w2.astype(jnp.bfloat16)

  # Pack the six (1, C) params into one small buffer (fewer inputs / DMAs).
  small = jnp.concatenate([ln1g, ln1b, bp, ln2g, ln2b, b2],
                          axis=0).astype(jnp.float32)       # (6, C)

  kernel = functools.partial(transformer_block_kernel,
                             head_nb=H, head_size=hs, approx_recip=approx_recip)

  def const(shape):  # weight/bias spec: same block every grid step (stays resident)
    nd = len(shape)
    return pl.BlockSpec(shape, lambda b, _nd=nd: (0,) * _nd)

  out = pl.pallas_call(
      kernel,
      out_shape=jax.ShapeDtypeStruct((B, T, C), x.dtype),
      grid_spec=pltpu.PrefetchScalarGridSpec(
          num_scalar_prefetch=0,
          grid=(B,),                                        # one batch element / step
          in_specs=[
              pl.BlockSpec((1, T, C), lambda b: (b, 0, 0)),  # x
              const((6, C)),                                 # packed LN/bias params
              const((1, 4 * C)),                             # FFN b1
              const((C, 3 * C)),                             # fused QKV weight (bf16)
              const((C, C)),                                 # output projection (bf16)
              const((C, 4 * C)),                             # FFN w1 (bf16)
              const((4 * C, C)),                             # FFN w2 (bf16)
          ],
          out_specs=pl.BlockSpec((1, T, C), lambda b: (b, 0, 0)),
          scratch_shapes=[pltpu.VMEM((T, C), jnp.float32)],  # concat'd head outputs
      ),
      compiler_params=pltpu.CompilerParams(
          dimension_semantics=("parallel",),                 # megacore on v7x
          vmem_limit_bytes=32 * 1024 * 1024),
  )(x, small, b1, wqkv, wp_bf, w1_bf, w2_bf)

  return out


def reference(x, wq, wk, wv, wp, bp, ln1g, ln1b, ln2g, ln2b, w1, b1, w2, b2):
  """Pure-JAX f32 reference mirroring the PyTorch TransformerBlock (eval mode)."""
  B, T, C = x.shape
  H, _, hs = wq.shape

  def ln(v, g, b, eps=1e-5):
    mu = v.mean(-1, keepdims=True)
    var = ((v - mu) ** 2).mean(-1, keepdims=True)
    return (v - mu) / jnp.sqrt(var + eps) * g + b

  y = ln(x, ln1g, ln1b)
  tril = jnp.tril(jnp.ones((T, T), dtype=bool))
  heads = []
  for h in range(H):
    q = y @ wq[h]
    k = y @ wk[h]
    v = y @ wv[h]
    s = (q @ jnp.swapaxes(k, -1, -2)) * (hs ** -0.5)
    s = jnp.where(tril, s, -jnp.inf)
    p = jax.nn.softmax(s, axis=-1)
    heads.append(p @ v)
  mha = jnp.concatenate(heads, axis=-1) @ wp + bp
  r1 = mha + x
  z = ln(r1, ln2g, ln2b)
  ffn = jnp.maximum(z @ w1 + b1, 0.0) @ w2 + b2
  return ffn + x


if __name__ == "__main__":
  # Config-equivalent: emb_size=32, head_nb=4 -> head_size = 8, block_size(T)=8, B=2.
  B, T, C, H = 2, 8, 32, 4
  hs = C // H

  key = jax.random.PRNGKey(0)
  ks = jax.random.split(key, 14)

  x = jax.random.normal(ks[0], (B, T, C), dtype=jnp.float32)
  wq = jax.random.normal(ks[1], (H, C, hs), dtype=jnp.float32) * 0.1
  wk = jax.random.normal(ks[2], (H, C, hs), dtype=jnp.float32) * 0.1
  wv = jax.random.normal(ks[3], (H, C, hs), dtype=jnp.float32) * 0.1
  wp = jax.random.normal(ks[4], (C, C), dtype=jnp.float32) * 0.1
  bp = jax.random.normal(ks[5], (1, C), dtype=jnp.float32) * 0.1
  ln1g = 1.0 + 0.1 * jax.random.normal(ks[6], (1, C), dtype=jnp.float32)
  ln1b = 0.1 * jax.random.normal(ks[7], (1, C), dtype=jnp.float32)
  ln2g = 1.0 + 0.1 * jax.random.normal(ks[8], (1, C), dtype=jnp.float32)
  ln2b = 0.1 * jax.random.normal(ks[9], (1, C), dtype=jnp.float32)
  w1 = jax.random.normal(ks[10], (C, 4 * C), dtype=jnp.float32) * 0.1
  b1 = jax.random.normal(ks[11], (1, 4 * C), dtype=jnp.float32) * 0.1
  w2 = jax.random.normal(ks[12], (4 * C, C), dtype=jnp.float32) * 0.1
  b2 = jax.random.normal(ks[13], (1, C), dtype=jnp.float32) * 0.1

  out = transformer_block(x, wq, wk, wv, wp, bp, ln1g, ln1b, ln2g, ln2b,
                          w1, b1, w2, b2, head_nb=H)
  out = jax.block_until_ready(out)

  ref = reference(x, wq, wk, wv, wp, bp, ln1g, ln1b, ln2g, ln2b, w1, b1, w2, b2)
  assert out.shape == (B, T, C)
  err = float(jnp.max(jnp.abs(out - ref)))
  # Kernel feeds bf16 to the MXU (f32 accumulation) + approx reciprocal; ref is f32.
  assert jnp.allclose(out, ref, atol=5e-2, rtol=5e-2), f"max abs err {err}"

  print("KERNEL_OK")
</pallas_src>

<mosaic_0001>
module attributes {stable_mosaic.version = 11 : i64} {
  func.func @transformer_block_kernel(%arg0: i32, %arg1: memref<1x8x32xf32, #tpu.memory_space<vmem>>, %arg2: memref<6x32xf32, #tpu.memory_space<vmem>>, %arg3: memref<1x128xf32, #tpu.memory_space<vmem>>, %arg4: memref<32x96xbf16, #tpu.memory_space<vmem>>, %arg5: memref<32x32xbf16, #tpu.memory_space<vmem>>, %arg6: memref<32x128xbf16, #tpu.memory_space<vmem>>, %arg7: memref<128x32xbf16, #tpu.memory_space<vmem>>, %arg8: memref<1x8x32xf32, #tpu.memory_space<vmem>>, %arg9: memref<8x32xf32, #tpu.memory_space<vmem>>) attributes {dimension_semantics = [#tpu.dimension_semantics<parallel>], iteration_bounds = array<i64: 2>, scalar_prefetch = 0 : i64, scratch_operands = 1 : i64, tpu.core_type = #tpu.core_type<tc>, window_params = [{transform_indices = @transform_0, window_bounds = array<i64: 1, 8, 32>}, {pipeline_mode = #tpu.pipeline_mode<synchronous>, transform_indices = @transform_1, window_bounds = array<i64: 6, 32>}, {pipeline_mode = #tpu.pipeline_mode<synchronous>, transform_indices = @transform_2, window_bounds = array<i64: 1, 128>}, {pipeline_mode = #tpu.pipeline_mode<synchronous>, transform_indices = @transform_3, window_bounds = array<i64: 32, 96>}, {pipeline_mode = #tpu.pipeline_mode<synchronous>, transform_indices = @transform_4, window_bounds = array<i64: 32, 32>}, {pipeline_mode = #tpu.pipeline_mode<synchronous>, transform_indices = @transform_5, window_bounds = array<i64: 32, 128>}, {pipeline_mode = #tpu.pipeline_mode<synchronous>, transform_indices = @transform_6, window_bounds = array<i64: 128, 32>}, {transform_indices = @transform_7, window_bounds = array<i64: 1, 8, 32>}]} {
    %c0 = arith.constant 0 : index
    %c0_0 = arith.constant 0 : index
    %c0_1 = arith.constant 0 : index
    %0 = vector.load %arg1[%c0, %c0_0, %c0_1] : memref<1x8x32xf32, #tpu.memory_space<vmem>>, vector<1x8x32xf32>
    %1 = vector.shape_cast %0 : vector<1x8x32xf32> to vector<8x32xf32>
    %c0_2 = arith.constant 0 : index
    %c0_3 = arith.constant 0 : index
    %2 = vector.load %arg2[%c0_2, %c0_3] : memref<6x32xf32, #tpu.memory_space<vmem>>, vector<1x32xf32>
    %c1 = arith.constant 1 : index
    %c0_4 = arith.constant 0 : index
    %3 = vector.load %arg2[%c1, %c0_4] : memref<6x32xf32, #tpu.memory_space<vmem>>, vector<1x32xf32>
    %c2 = arith.constant 2 : index
    %c0_5 = arith.constant 0 : index
    %4 = vector.load %arg2[%c2, %c0_5] : memref<6x32xf32, #tpu.memory_space<vmem>>, vector<1x32xf32>
    %c3 = arith.constant 3 : index
    %c0_6 = arith.constant 0 : index
    %5 = vector.load %arg2[%c3, %c0_6] : memref<6x32xf32, #tpu.memory_space<vmem>>, vector<1x32xf32>
    %c4 = arith.constant 4 : index
    %c0_7 = arith.constant 0 : index
    %6 = vector.load %arg2[%c4, %c0_7] : memref<6x32xf32, #tpu.memory_space<vmem>>, vector<1x32xf32>
    %c5 = arith.constant 5 : index
    %c0_8 = arith.constant 0 : index
    %7 = vector.load %arg2[%c5, %c0_8] : memref<6x32xf32, #tpu.memory_space<vmem>>, vector<1x32xf32>
    %cst = arith.constant dense<0.000000e+00> : vector<8xf32>
    %8 = vector.multi_reduction <add>, %1, %cst [1] : vector<8x32xf32> to vector<8xf32>
    %9 = vector.shape_cast %8 : vector<8xf32> to vector<8x1xf32>
    %cst_9 = arith.constant 3.200000e+01 : f32
    %10 = vector.broadcast %cst_9 : f32 to vector<8x1xf32>
    %11 = arith.divf %9, %10 : vector<8x1xf32>
    %12 = vector.broadcast %11 : vector<8x1xf32> to vector<8x32xf32>
    %13 = arith.subf %1, %12 : vector<8x32xf32>
    %14 = arith.mulf %13, %13 : vector<8x32xf32>
    %cst_10 = arith.constant dense<0.000000e+00> : vector<8xf32>
    %15 = vector.multi_reduction <add>, %14, %cst_10 [1] : vector<8x32xf32> to vector<8xf32>
    %16 = vector.shape_cast %15 : vector<8xf32> to vector<8x1xf32>
    %cst_11 = arith.constant 3.200000e+01 : f32
    %17 = vector.broadcast %cst_11 : f32 to vector<8x1xf32>
    %18 = arith.divf %16, %17 : vector<8x1xf32>
    %cst_12 = arith.constant 9.99999974E-6 : f32
    %19 = vector.broadcast %cst_12 : f32 to vector<8x1xf32>
    %20 = arith.addf %18, %19 : vector<8x1xf32>
    %21 = math.rsqrt %20 : vector<8x1xf32>
    %22 = vector.broadcast %21 : vector<8x1xf32> to vector<8x32xf32>
    %23 = arith.mulf %13, %22 : vector<8x32xf32>
    %24 = vector.broadcast %2 : vector<1x32xf32> to vector<8x32xf32>
    %25 = arith.mulf %23, %24 : vector<8x32xf32>
    %26 = vector.broadcast %3 : vector<1x32xf32> to vector<8x32xf32>
    %27 = arith.addf %25, %26 : vector<8x32xf32>
    %28 = arith.truncf %27 : vector<8x32xf32> to vector<8x32xbf16>
    %c0_13 = arith.constant 0 : index
    %c0_14 = arith.constant 0 : index
    %29 = vector.load %arg4[%c0_13, %c0_14] : memref<32x96xbf16, #tpu.memory_space<vmem>>, vector<32x96xbf16>
    %cst_15 = arith.constant dense<0.000000e+00> : vector<8x96xf32>
    %30 = tpu.matmul %28, %29, %cst_15 {dimension_numbers = #tpu.dot_dimension_numbers<[1], [0], [0], [1], [0, 0, 1, 1], [], []>} : vector<8x32xbf16>, vector<32x96xbf16>, vector<8x96xf32> -> vector<8x96xf32>
    %31 = tpu.iota {dimensions = array<i32: 0>} : vector<8x8xi32>
    %32 = tpu.iota {dimensions = array<i32: 1>} : vector<8x8xi32>
    %33 = arith.cmpi sge, %31, %32 : vector<8x8xi32>
    %cst_16 = arith.constant 0.000000e+00 : f32
    %cst_17 = arith.constant -1.000000e+30 : f32
    %34 = vector.broadcast %cst_16 : f32 to vector<8x8xf32>
    %35 = vector.broadcast %cst_17 : f32 to vector<8x8xf32>
    %36 = arith.select %33, %34, %35 : vector<8x8xi1>, vector<8x8xf32>
    %37 = vector.extract_strided_slice %30 {offsets = [0, 0], sizes = [8, 8], strides = [1, 1]} : vector<8x96xf32> to vector<8x8xf32>
    %38 = vector.extract_strided_slice %30 {offsets = [0, 32], sizes = [8, 8], strides = [1, 1]} : vector<8x96xf32> to vector<8x8xf32>
    %39 = vector.extract_strided_slice %30 {offsets = [0, 64], sizes = [8, 8], strides = [1, 1]} : vector<8x96xf32> to vector<8x8xf32>
    %40 = arith.truncf %37 : vector<8x8xf32> to vector<8x8xbf16>
    %41 = arith.truncf %38 : vector<8x8xf32> to vector<8x8xbf16>
    %cst_18 = arith.constant dense<0.000000e+00> : vector<8x8xf32>
    %42 = tpu.matmul %40, %41, %cst_18 {dimension_numbers = #tpu.dot_dimension_numbers<[1], [1], [0], [0], [0, 0, 1, 0], [], []>} : vector<8x8xbf16>, vector<8x8xbf16>, vector<8x8xf32> -> vector<8x8xf32>
    %43 = arith.addf %42, %36 : vector<8x8xf32>
    %cst_19 = arith.constant dense<0xFF800000> : vector<8xf32>
    %44 = vector.multi_reduction <maximumf>, %43, %cst_19 [1] : vector<8x8xf32> to vector<8xf32>
    %45 = vector.shape_cast %44 : vector<8xf32> to vector<8x1xf32>
    %46 = vector.broadcast %45 : vector<8x1xf32> to vector<8x8xf32>
    %47 = arith.subf %43, %46 : vector<8x8xf32>
    %48 = math.exp %47 : vector<8x8xf32>
    %cst_20 = arith.constant dense<0.000000e+00> : vector<8xf32>
    %49 = vector.multi_reduction <add>, %48, %cst_20 [1] : vector<8x8xf32> to vector<8xf32>
    %50 = vector.shape_cast %49 : vector<8xf32> to vector<8x1xf32>
    %51 = tpu.reciprocal %50 {approx = true} : vector<8x1xf32> -> vector<8x1xf32>
    %52 = vector.broadcast %51 : vector<8x1xf32> to vector<8x8xf32>
    %53 = arith.mulf %48, %52 : vector<8x8xf32>
    %54 = arith.truncf %53 : vector<8x8xf32> to vector<8x8xbf16>
    %55 = arith.truncf %39 : vector<8x8xf32> to vector<8x8xbf16>
    %cst_21 = arith.constant dense<0.000000e+00> : vector<8x8xf32>
    %56 = tpu.matmul %54, %55, %cst_21 {dimension_numbers = #tpu.dot_dimension_numbers<[1], [0], [0], [1], [0, 0, 1, 1], [], []>} : vector<8x8xbf16>, vector<8x8xbf16>, vector<8x8xf32> -> vector<8x8xf32>
    %c0_22 = arith.constant 0 : index
    %c0_23 = arith.constant 0 : index
    %57 = vector.load %arg9[%c0_22, %c0_23] : memref<8x32xf32, #tpu.memory_space<vmem>>, vector<8x8xf32>
    tpu.vector_store %arg9[%c0_22, %c0_23], %56 {strides = array<i32>} : memref<8x32xf32, #tpu.memory_space<vmem>>, vector<8x8xf32>,
    %58 = vector.extract_strided_slice %30 {offsets = [0, 8], sizes = [8, 8], strides = [1, 1]} : vector<8x96xf32> to vector<8x8xf32>
    %59 = vector.extract_strided_slice %30 {offsets = [0, 40], sizes = [8, 8], strides = [1, 1]} : vector<8x96xf32> to vector<8x8xf32>
    %60 = vector.extract_strided_slice %30 {offsets = [0, 72], sizes = [8, 8], strides = [1, 1]} : vector<8x96xf32> to vector<8x8xf32>
    %61 = arith.truncf %58 : vector<8x8xf32> to vector<8x8xbf16>
    %62 = arith.truncf %59 : vector<8x8xf32> to vector<8x8xbf16>
    %cst_24 = arith.constant dense<0.000000e+00> : vector<8x8xf32>
    %63 = tpu.matmul %61, %62, %cst_24 {dimension_numbers = #tpu.dot_dimension_numbers<[1], [1], [0], [0], [0, 0, 1, 0], [], []>} : vector<8x8xbf16>, vector<8x8xbf16>, vector<8x8xf32> -> vector<8x8xf32>
    %64 = arith.addf %63, %36 : vector<8x8xf32>
    %cst_25 = arith.constant dense<0xFF800000> : vector<8xf32>
    %65 = vector.multi_reduction <maximumf>, %64, %cst_25 [1] : vector<8x8xf32> to vector<8xf32>
    %66 = vector.shape_cast %65 : vector<8xf32> to vector<8x1xf32>
    %67 = vector.broadcast %66 : vector<8x1xf32> to vector<8x8xf32>
    %68 = arith.subf %64, %67 : vector<8x8xf32>
    %69 = math.exp %68 : vector<8x8xf32>
    %cst_26 = arith.constant dense<0.000000e+00> : vector<8xf32>
    %70 = vector.multi_reduction <add>, %69, %cst_26 [1] : vector<8x8xf32> to vector<8xf32>
    %71 = vector.shape_cast %70 : vector<8xf32> to vector<8x1xf32>
    %72 = tpu.reciprocal %71 {approx = true} : vector<8x1xf32> -> vector<8x1xf32>
    %73 = vector.broadcast %72 : vector<8x1xf32> to vector<8x8xf32>
    %74 = arith.mulf %69, %73 : vector<8x8xf32>
    %75 = arith.truncf %74 : vector<8x8xf32> to vector<8x8xbf16>
    %76 = arith.truncf %60 : vector<8x8xf32> to vector<8x8xbf16>
    %cst_27 = arith.constant dense<0.000000e+00> : vector<8x8xf32>
    %77 = tpu.matmul %75, %76, %cst_27 {dimension_numbers = #tpu.dot_dimension_numbers<[1], [0], [0], [1], [0, 0, 1, 1], [], []>} : vector<8x8xbf16>, vector<8x8xbf16>, vector<8x8xf32> -> vector<8x8xf32>
    %c0_28 = arith.constant 0 : index
    %c8 = arith.constant 8 : index
    %78 = vector.load %arg9[%c0_28, %c8] : memref<8x32xf32, #tpu.memory_space<vmem>>, vector<8x8xf32>
    tpu.vector_store %arg9[%c0_28, %c8], %77 {strides = array<i32>} : memref<8x32xf32, #tpu.memory_space<vmem>>, vector<8x8xf32>,
    %79 = vector.extract_strided_slice %30 {offsets = [0, 16], sizes = [8, 8], strides = [1, 1]} : vector<8x96xf32> to vector<8x8xf32>
    %80 = vector.extract_strided_slice %30 {offsets = [0, 48], sizes = [8, 8], strides = [1, 1]} : vector<8x96xf32> to vector<8x8xf32>
    %81 = vector.extract_strided_slice %30 {offsets = [0, 80], sizes = [8, 8], strides = [1, 1]} : vector<8x96xf32> to vector<8x8xf32>
    %82 = arith.truncf %79 : vector<8x8xf32> to vector<8x8xbf16>
    %83 = arith.truncf %80 : vector<8x8xf32> to vector<8x8xbf16>
    %cst_29 = arith.constant dense<0.000000e+00> : vector<8x8xf32>
    %84 = tpu.matmul %82, %83, %cst_29 {dimension_numbers = #tpu.dot_dimension_numbers<[1], [1], [0], [0], [0, 0, 1, 0], [], []>} : vector<8x8xbf16>, vector<8x8xbf16>, vector<8x8xf32> -> vector<8x8xf32>
    %85 = arith.addf %84, %36 : vector<8x8xf32>
    %cst_30 = arith.constant dense<0xFF800000> : vector<8xf32>
    %86 = vector.multi_reduction <maximumf>, %85, %cst_30 [1] : vector<8x8xf32> to vector<8xf32>
    %87 = vector.shape_cast %86 : vector<8xf32> to vector<8x1xf32>
    %88 = vector.broadcast %87 : vector<8x1xf32> to vector<8x8xf32>
    %89 = arith.subf %85, %88 : vector<8x8xf32>
    %90 = math.exp %89 : vector<8x8xf32>
    %cst_31 = arith.constant dense<0.000000e+00> : vector<8xf32>
    %91 = vector.multi_reduction <add>, %90, %cst_31 [1] : vector<8x8xf32> to vector<8xf32>
    %92 = vector.shape_cast %91 : vector<8xf32> to vector<8x1xf32>
    %93 = tpu.reciprocal %92 {approx = true} : vector<8x1xf32> -> vector<8x1xf32>
    %94 = vector.broadcast %93 : vector<8x1xf32> to vector<8x8xf32>
    %95 = arith.mulf %90, %94 : vector<8x8xf32>
    %96 = arith.truncf %95 : vector<8x8xf32> to vector<8x8xbf16>
    %97 = arith.truncf %81 : vector<8x8xf32> to vector<8x8xbf16>
    %cst_32 = arith.constant dense<0.000000e+00> : vector<8x8xf32>
    %98 = tpu.matmul %96, %97, %cst_32 {dimension_numbers = #tpu.dot_dimension_numbers<[1], [0], [0], [1], [0, 0, 1, 1], [], []>} : vector<8x8xbf16>, vector<8x8xbf16>, vector<8x8xf32> -> vector<8x8xf32>
    %c0_33 = arith.constant 0 : index
    %c16 = arith.constant 16 : index
    %99 = vector.load %arg9[%c0_33, %c16] : memref<8x32xf32, #tpu.memory_space<vmem>>, vector<8x8xf32>
    tpu.vector_store %arg9[%c0_33, %c16], %98 {strides = array<i32>} : memref<8x32xf32, #tpu.memory_space<vmem>>, vector<8x8xf32>,
    %100 = vector.extract_strided_slice %30 {offsets = [0, 24], sizes = [8, 8], strides = [1, 1]} : vector<8x96xf32> to vector<8x8xf32>
    %101 = vector.extract_strided_slice %30 {offsets = [0, 56], sizes = [8, 8], strides = [1, 1]} : vector<8x96xf32> to vector<8x8xf32>
    %102 = vector.extract_strided_slice %30 {offsets = [0, 88], sizes = [8, 8], strides = [1, 1]} : vector<8x96xf32> to vector<8x8xf32>
    %103 = arith.truncf %100 : vector<8x8xf32> to vector<8x8xbf16>
    %104 = arith.truncf %101 : vector<8x8xf32> to vector<8x8xbf16>
    %cst_34 = arith.constant dense<0.000000e+00> : vector<8x8xf32>
    %105 = tpu.matmul %103, %104, %cst_34 {dimension_numbers = #tpu.dot_dimension_numbers<[1], [1], [0], [0], [0, 0, 1, 0], [], []>} : vector<8x8xbf16>, vector<8x8xbf16>, vector<8x8xf32> -> vector<8x8xf32>
    %106 = arith.addf %105, %36 : vector<8x8xf32>
    %cst_35 = arith.constant dense<0xFF800000> : vector<8xf32>
    %107 = vector.multi_reduction <maximumf>, %106, %cst_35 [1] : vector<8x8xf32> to vector<8xf32>
    %108 = vector.shape_cast %107 : vector<8xf32> to vector<8x1xf32>
    %109 = vector.broadcast %108 : vector<8x1xf32> to vector<8x8xf32>
    %110 = arith.subf %106, %109 : vector<8x8xf32>
    %111 = math.exp %110 : vector<8x8xf32>
    %cst_36 = arith.constant dense<0.000000e+00> : vector<8xf32>
    %112 = vector.multi_reduction <add>, %111, %cst_36 [1] : vector<8x8xf32> to vector<8xf32>
    %113 = vector.shape_cast %112 : vector<8xf32> to vector<8x1xf32>
    %114 = tpu.reciprocal %113 {approx = true} : vector<8x1xf32> -> vector<8x1xf32>
    %115 = vector.broadcast %114 : vector<8x1xf32> to vector<8x8xf32>
    %116 = arith.mulf %111, %115 : vector<8x8xf32>
    %117 = arith.truncf %116 : vector<8x8xf32> to vector<8x8xbf16>
    %118 = arith.truncf %102 : vector<8x8xf32> to vector<8x8xbf16>
    %cst_37 = arith.constant dense<0.000000e+00> : vector<8x8xf32>
    %119 = tpu.matmul %117, %118, %cst_37 {dimension_numbers = #tpu.dot_dimension_numbers<[1], [0], [0], [1], [0, 0, 1, 1], [], []>} : vector<8x8xbf16>, vector<8x8xbf16>, vector<8x8xf32> -> vector<8x8xf32>
    %c0_38 = arith.constant 0 : index
    %c24 = arith.constant 24 : index
    %120 = vector.load %arg9[%c0_38, %c24] : memref<8x32xf32, #tpu.memory_space<vmem>>, vector<8x8xf32>
    tpu.vector_store %arg9[%c0_38, %c24], %119 {strides = array<i32>} : memref<8x32xf32, #tpu.memory_space<vmem>>, vector<8x8xf32>,
    %c0_39 = arith.constant 0 : index
    %c0_40 = arith.constant 0 : index
    %121 = vector.load %arg9[%c0_39, %c0_40] : memref<8x32xf32, #tpu.memory_space<vmem>>, vector<8x32xf32>
    %122 = arith.truncf %121 : vector<8x32xf32> to vector<8x32xbf16>
    %c0_41 = arith.constant 0 : index
    %c0_42 = arith.constant 0 : index
    %123 = vector.load %arg5[%c0_41, %c0_42] : memref<32x32xbf16, #tpu.memory_space<vmem>>, vector<32x32xbf16>
    %cst_43 = arith.constant dense<0.000000e+00> : vector<8x32xf32>
    %124 = tpu.matmul %122, %123, %cst_43 {dimension_numbers = #tpu.dot_dimension_numbers<[1], [0], [0], [1], [0, 0, 1, 1], [], []>} : vector<8x32xbf16>, vector<32x32xbf16>, vector<8x32xf32> -> vector<8x32xf32>
    %125 = vector.broadcast %4 : vector<1x32xf32> to vector<8x32xf32>
    %126 = arith.addf %124, %125 : vector<8x32xf32>
    %127 = arith.addf %126, %1 : vector<8x32xf32>
    %cst_44 = arith.constant dense<0.000000e+00> : vector<8xf32>
    %128 = vector.multi_reduction <add>, %127, %cst_44 [1] : vector<8x32xf32> to vector<8xf32>
    %129 = vector.shape_cast %128 : vector<8xf32> to vector<8x1xf32>
    %cst_45 = arith.constant 3.200000e+01 : f32
    %130 = vector.broadcast %cst_45 : f32 to vector<8x1xf32>
    %131 = arith.divf %129, %130 : vector<8x1xf32>
    %132 = vector.broadcast %131 : vector<8x1xf32> to vector<8x32xf32>
    %133 = arith.subf %127, %132 : vector<8x32xf32>
    %134 = arith.mulf %133, %133 : vector<8x32xf32>
    %cst_46 = arith.constant dense<0.000000e+00> : vector<8xf32>
    %135 = vector.multi_reduction <add>, %134, %cst_46 [1] : vector<8x32xf32> to vector<8xf32>
    %136 = vector.shape_cast %135 : vector<8xf32> to vector<8x1xf32>
    %cst_47 = arith.constant 3.200000e+01 : f32
    %137 = vector.broadcast %cst_47 : f32 to vector<8x1xf32>
    %138 = arith.divf %136, %137 : vector<8x1xf32>
    %cst_48 = arith.constant 9.99999974E-6 : f32
    %139 = vector.broadcast %cst_48 : f32 to vector<8x1xf32>
    %140 = arith.addf %138, %139 : vector<8x1xf32>
    %141 = math.rsqrt %140 : vector<8x1xf32>
    %142 = vector.broadcast %141 : vector<8x1xf32> to vector<8x32xf32>
    %143 = arith.mulf %133, %142 : vector<8x32xf32>
    %144 = vector.broadcast %5 : vector<1x32xf32> to vector<8x32xf32>
    %145 = arith.mulf %143, %144 : vector<8x32xf32>
    %146 = vector.broadcast %6 : vector<1x32xf32> to vector<8x32xf32>
    %147 = arith.addf %145, %146 : vector<8x32xf32>
    %148 = arith.truncf %147 : vector<8x32xf32> to vector<8x32xbf16>
    %c0_49 = arith.constant 0 : index
    %c0_50 = arith.constant 0 : index
    %149 = vector.load %arg6[%c0_49, %c0_50] : memref<32x128xbf16, #tpu.memory_space<vmem>>, vector<32x128xbf16>
    %cst_51 = arith.constant dense<0.000000e+00> : vector<8x128xf32>
    %150 = tpu.matmul %148, %149, %cst_51 {dimension_numbers = #tpu.dot_dimension_numbers<[1], [0], [0], [1], [0, 0, 1, 1], [], []>} : vector<8x32xbf16>, vector<32x128xbf16>, vector<8x128xf32> -> vector<8x128xf32>
    %c0_52 = arith.constant 0 : index
    %c0_53 = arith.constant 0 : index
    %151 = vector.load %arg3[%c0_52, %c0_53] : memref<1x128xf32, #tpu.memory_space<vmem>>, vector<1x128xf32>
    %152 = vector.broadcast %151 : vector<1x128xf32> to vector<8x128xf32>
    %153 = arith.addf %150, %152 : vector<8x128xf32>
    %cst_54 = arith.constant 0.000000e+00 : f32
    %154 = vector.broadcast %cst_54 : f32 to vector<8x128xf32>
    %155 = arith.maximumf %153, %154 : vector<8x128xf32>
    %156 = arith.truncf %155 : vector<8x128xf32> to vector<8x128xbf16>
    %c0_55 = arith.constant 0 : index
    %c0_56 = arith.constant 0 : index
    %157 = vector.load %arg7[%c0_55, %c0_56] : memref<128x32xbf16, #tpu.memory_space<vmem>>, vector<128x32xbf16>
    %cst_57 = arith.constant dense<0.000000e+00> : vector<8x32xf32>
    %158 = tpu.matmul %156, %157, %cst_57 {dimension_numbers = #tpu.dot_dimension_numbers<[1], [0], [0], [1], [0, 0, 1, 1], [], []>} : vector<8x128xbf16>, vector<128x32xbf16>, vector<8x32xf32> -> vector<8x32xf32>
    %159 = vector.broadcast %7 : vector<1x32xf32> to vector<8x32xf32>
    %160 = arith.addf %158, %159 : vector<8x32xf32>
    %161 = arith.addf %160, %1 : vector<8x32xf32>
    %c0_58 = arith.constant 0 : index
    %c0_59 = arith.constant 0 : index
    %c0_60 = arith.constant 0 : index
    %162 = vector.load %arg8[%c0_58, %c0_59, %c0_60] : memref<1x8x32xf32, #tpu.memory_space<vmem>>, vector<1x8x32xf32>
    %163 = vector.shape_cast %162 : vector<1x8x32xf32> to vector<8x32xf32>
    %164 = vector.shape_cast %161 : vector<8x32xf32> to vector<1x8x32xf32>
    tpu.vector_store %arg8[%c0_58, %c0_59, %c0_60], %164 {strides = array<i32>} : memref<1x8x32xf32, #tpu.memory_space<vmem>>, vector<1x8x32xf32>,
    return
  }
  func.func @transform_0(%arg0: i32) -> (i32, i32, i32) {
    %c0_i32 = arith.constant 0 : i32
    %c0_i32_0 = arith.constant 0 : i32
    %c0_i32_1 = arith.constant 0 : i32
    return %arg0, %c0_i32, %c0_i32_0 : i32, i32, i32
  }
  func.func @transform_1(%arg0: i32) -> (i32, i32) {
    %c0_i32 = arith.constant 0 : i32
    %c0_i32_0 = arith.constant 0 : i32
    %c0_i32_1 = arith.constant 0 : i32
    return %c0_i32, %c0_i32_0 : i32, i32
  }
  func.func @transform_2(%arg0: i32) -> (i32, i32) {
    %c0_i32 = arith.constant 0 : i32
    %c0_i32_0 = arith.constant 0 : i32
    %c0_i32_1 = arith.constant 0 : i32
    return %c0_i32, %c0_i32_0 : i32, i32
  }
  func.func @transform_3(%arg0: i32) -> (i32, i32) {
    %c0_i32 = arith.constant 0 : i32
    %c0_i32_0 = arith.constant 0 : i32
    %c0_i32_1 = arith.constant 0 : i32
    return %c0_i32, %c0_i32_0 : i32, i32
  }
  func.func @transform_4(%arg0: i32) -> (i32, i32) {
    %c0_i32 = arith.constant 0 : i32
    %c0_i32_0 = arith.constant 0 : i32
    %c0_i32_1 = arith.constant 0 : i32
    return %c0_i32, %c0_i32_0 : i32, i32
  }
  func.func @transform_5(%arg0: i32) -> (i32, i32) {
    %c0_i32 = arith.constant 0 : i32
    %c0_i32_0 = arith.constant 0 : i32
    %c0_i32_1 = arith.constant 0 : i32
    return %c0_i32, %c0_i32_0 : i32, i32
  }
  func.func @transform_6(%arg0: i32) -> (i32, i32) {
    %c0_i32 = arith.constant 0 : i32
    %c0_i32_0 = arith.constant 0 : i32
    %c0_i32_1 = arith.constant 0 : i32
    return %c0_i32, %c0_i32_0 : i32, i32
  }
  func.func @transform_7(%arg0: i32) -> (i32, i32, i32) {
    %c0_i32 = arith.constant 0 : i32
    %c0_i32_0 = arith.constant 0 : i32
    %c0_i32_1 = arith.constant 0 : i32
    return %arg0, %c0_i32, %c0_i32_0 : i32, i32, i32
  }
}

</mosaic_0001>

<llo_original>
// kernel: tpu_custom_call.1
$region0: #{tpu_custom_call.1}
  #allocation0 [shape = 'u32[]', space=smem, size = 0x4, offset = 0x4, fixed_abs, tag = 'smem constant byte address 0x4 - core index']
  #allocation1 [shape = 'u32[72,128]{1,0:T(1,128)}', space=vmem, size = 0x9000, scoped, tag = 'internal scratch']
  #allocation2 [shape = 'f32[8,32]{1,0:T(8,128)}', space=vmem, size = 0x1000, scoped, tag = 'scratch operand']
  %s0 = inlined_call_operand.vmem [shape: f32[2,8,32], index: 0, kind: input, shape index: {}]
  %s1 = inlined_call_operand.vmem [shape: f32[6,32], index: 1, kind: input, shape index: {}]
  %s2 = inlined_call_operand.vmem [shape: f32[1,128], index: 2, kind: input, shape index: {}]
  %s3 = inlined_call_operand.vmem [shape: bf16[32,96], index: 3, kind: input, shape index: {}]
  %s4 = inlined_call_operand.vmem [shape: bf16[32,32], index: 4, kind: input, shape index: {}]
  %s5 = inlined_call_operand.vmem [shape: bf16[32,128], index: 5, kind: input, shape index: {}]
  %s6 = inlined_call_operand.vmem [shape: bf16[128,32], index: 6, kind: input, shape index: {}]
  %s7 = inlined_call_operand.hbm [shape: f32[2,8,32], index: 7, kind: output, shape index: {}]
  %s8 = sld [smem:[#allocation0]]
  $region61: #{tpu_custom_call.1} parent=0
    _
  %s10 = ssub.s32 1, %s8
  %s11 = scalar_select 0, %s10, %s8
  $region1: #{tpu_custom_call.1} parent=0
    #allocation3 [shape = 'u8[8192]{0}', space=vmem, size = 0x2000, scoped, tag = 'output window, operand 0']
    #allocation4 [shape = 's32[2]{0}', space=sflag, size = 0x8, scoped, tag = 'scoped memory for tpu_custom_call.1']
    %12 = vsyncpa [#allocation4], 0
    %s13 = scalar_lea.sflag [#allocation4], 1
    %14 = vsyncpa %s13, 0
    loop: start=0, step=1, limit=4
    $region2: #{tpu_custom_call.1} parent=1 // loop_pre_header
      _
    $region3: #{tpu_custom_call.1} parent=1 // loop_header
      %s16 = sphi 0, %s20
      %p17 = scmp.ge.s32.totalorder %s16, 4
      %s26 = sphi 0, %s28
      %s29 = sphi 0, %s26
      %s30 = sphi 0, %s29
      %s46 = sphi 0, %s30
      %s50 = sphi 0, %s50
      %s52 = sphi 0, %s50
      %s53 = sphi 0, %s52
      %s67 = sphi 0, %s53
      %s71 = sphi 0, %s71
      %s73 = sphi 0, %s71
      %s74 = sphi 0, %s73
      %s88 = sphi 0, %s74
      %s92 = sphi 0, %s92
      %s94 = sphi 0, %s92
      %s95 = sphi 0, %s94
      %s109 = sphi 0, %s95
      %s113 = sphi 0, %s113
      %s115 = sphi 0, %s113
      %s116 = sphi 0, %s115
      %s130 = sphi 0, %s116
      %s134 = sphi 0, %s134
      %s136 = sphi 0, %s134
      %s137 = sphi 0, %s136
      %s151 = sphi 0, %s137
      %s155 = sphi 0, %s155
      %s157 = sphi 0, %s155
      %s158 = sphi 0, %s157
      %s172 = sphi 0, %s158
      %s178 = sphi 0, %s180
      %s181 = sphi 0, %s178
      %s182 = sphi 0, %s181
      %s198 = sphi 0, %s182
    $region4: #{tpu_custom_call.1} parent=1 // loop_header_branch
      %19 = sbr.rel (%p17) target = $region8
    $region5: #{tpu_custom_call.1} parent=1 // loop_body
      %s21 = ssub.s32 %s16, 1
      %s22 = ssub.s32 %s16, 2
      %s23 = sadd.s32 %s16, 1
      %s24 = ssub.s32 %s16, %s23
      %p25 = scmp.eq.s32.totalorder %s24, 0
      %s27 = sadd.s32 %s26, 1
      %s28 = scalar_select %p25, %s26, %s27
      %p31 = pneg %p25
      %p32 = scmp.eq.s32.totalorder %s16, 1
      %p33 = por %p31, %p32
      %p34 = scmp.ne.s32.totalorder %s26, %s29
      %p35 = scmp.eq.s32.totalorder %s16, 0
      %p36 = por %p34, %p35
      %p37 = scmp.ne.s32.totalorder %s26, %s29
      %p38 = scmp.eq.s32.totalorder %s21, 1
      %p39 = por %p37, %p38
      %p40 = scmp.ne.s32.totalorder %s29, %s30
      %p41 = scmp.eq.s32.totalorder %s21, 0
      %p42 = por %p40, %p41
      %p43 = scmp.ne.s32.totalorder %s29, %s30
      %p44 = scmp.eq.s32.totalorder %s22, 1
      %p45 = por %p43, %p44
      %p47 = scmp.ne.s32.totalorder %s30, %s46
      %p48 = scmp.eq.s32.totalorder %s22, 0
      %p49 = por %p47, %p48
      %s51 = sadd.s32 %s50, 1
      %p54 = scmp.eq.s32.totalorder %s16, 1
      %p55 = scmp.ne.s32.totalorder %s50, %s52
      %p56 = scmp.eq.s32.totalorder %s16, 0
      %p57 = por %p55, %p56
      %p58 = scmp.ne.s32.totalorder %s50, %s52
      %p59 = scmp.eq.s32.totalorder %s21, 1
      %p60 = por %p58, %p59
      %p61 = scmp.ne.s32.totalorder %s52, %s53
      %p62 = scmp.eq.s32.totalorder %s21, 0
      %p63 = por %p61, %p62
      %p64 = scmp.ne.s32.totalorder %s52, %s53
      %p65 = scmp.eq.s32.totalorder %s22, 1
      %p66 = por %p64, %p65
      %p68 = scmp.ne.s32.totalorder %s53, %s67
      %p69 = scmp.eq.s32.totalorder %s22, 0
      %p70 = por %p68, %p69
      %s72 = sadd.s32 %s71, 1
      %p75 = scmp.eq.s32.totalorder %s16, 1
      %p76 = scmp.ne.s32.totalorder %s71, %s73
      %p77 = scmp.eq.s32.totalorder %s16, 0
      %p78 = por %p76, %p77
      %p79 = scmp.ne.s32.totalorder %s71, %s73
      %p80 = scmp.eq.s32.totalorder %s21, 1
      %p81 = por %p79, %p80
      %p82 = scmp.ne.s32.totalorder %s73, %s74
      %p83 = scmp.eq.s32.totalorder %s21, 0
      %p84 = por %p82, %p83
      %p85 = scmp.ne.s32.totalorder %s73, %s74
      %p86 = scmp.eq.s32.totalorder %s22, 1
      %p87 = por %p85, %p86
      %p89 = scmp.ne.s32.totalorder %s74, %s88
      %p90 = scmp.eq.s32.totalorder %s22, 0
      %p91 = por %p89, %p90
      %s93 = sadd.s32 %s92, 1
      %p96 = scmp.eq.s32.totalorder %s16, 1
      %p97 = scmp.ne.s32.totalorder %s92, %s94
      %p98 = scmp.eq.s32.totalorder %s16, 0
      %p99 = por %p97, %p98
      %p100 = scmp.ne.s32.totalorder %s92, %s94
      %p101 = scmp.eq.s32.totalorder %s21, 1
      %p102 = por %p100, %p101
      %p103 = scmp.ne.s32.totalorder %s94, %s95
      %p104 = scmp.eq.s32.totalorder %s21, 0
      %p105 = por %p103, %p104
      %p106 = scmp.ne.s32.totalorder %s94, %s95
      %p107 = scmp.eq.s32.totalorder %s22, 1
      %p108 = por %p106, %p107
      %p110 = scmp.ne.s32.totalorder %s95, %s109
      %p111 = scmp.eq.s32.totalorder %s22, 0
      %p112 = por %p110, %p111
      %s114 = sadd.s32 %s113, 1
      %p117 = scmp.eq.s32.totalorder %s16, 1
      %p118 = scmp.ne.s32.totalorder %s113, %s115
      %p119 = scmp.eq.s32.totalorder %s16, 0
      %p120 = por %p118, %p119
      %p121 = scmp.ne.s32.totalorder %s113, %s115
      %p122 = scmp.eq.s32.totalorder %s21, 1
      %p123 = por %p121, %p122
      %p124 = scmp.ne.s32.totalorder %s115, %s116
      %p125 = scmp.eq.s32.totalorder %s21, 0
      %p126 = por %p124, %p125
      %p127 = scmp.ne.s32.totalorder %s115, %s116
      %p128 = scmp.eq.s32.totalorder %s22, 1
      %p129 = por %p127, %p128
      %p131 = scmp.ne.s32.totalorder %s116, %s130
      %p132 = scmp.eq.s32.totalorder %s22, 0
      %p133 = por %p131, %p132
      %s135 = sadd.s32 %s134, 1
      %p138 = scmp.eq.s32.totalorder %s16, 1
      %p139 = scmp.ne.s32.totalorder %s134, %s136
      %p140 = scmp.eq.s32.totalorder %s16, 0
      %p141 = por %p139, %p140
      %p142 = scmp.ne.s32.totalorder %s134, %s136
      %p143 = scmp.eq.s32.totalorder %s21, 1
      %p144 = por %p142, %p143
      %p145 = scmp.ne.s32.totalorder %s136, %s137
      %p146 = scmp.eq.s32.totalorder %s21, 0
      %p147 = por %p145, %p146
      %p148 = scmp.ne.s32.totalorder %s136, %s137
      %p149 = scmp.eq.s32.totalorder %s22, 1
      %p150 = por %p148, %p149
      %p152 = scmp.ne.s32.totalorder %s137, %s151
      %p153 = scmp.eq.s32.totalorder %s22, 0
      %p154 = por %p152, %p153
      %s156 = sadd.s32 %s155, 1
      %p159 = scmp.eq.s32.totalorder %s16, 1
      %p160 = scmp.ne.s32.totalorder %s155, %s157
      %p161 = scmp.eq.s32.totalorder %s16, 0
      %p162 = por %p160, %p161
      %p163 = scmp.ne.s32.totalorder %s155, %s157
      %p164 = scmp.eq.s32.totalorder %s21, 1
      %p165 = por %p163, %p164
      %p166 = scmp.ne.s32.totalorder %s157, %s158
      %p167 = scmp.eq.s32.totalorder %s21, 0
      %p168 = por %p166, %p167
      %p169 = scmp.ne.s32.totalorder %s157, %s158
      %p170 = scmp.eq.s32.totalorder %s22, 1
      %p171 = por %p169, %p170
      %p173 = scmp.ne.s32.totalorder %s158, %s172
      %p174 = scmp.eq.s32.totalorder %s22, 0
      %p175 = por %p173, %p174
      %s176 = ssub.s32 %s16, %s23
      %p177 = scmp.eq.s32.totalorder %s176, 0
      %s179 = sadd.s32 %s178, 1
      %s180 = scalar_select %p177, %s178, %s179
      %p183 = pneg %p177
      %p184 = scmp.eq.s32.totalorder %s16, 1
      %p185 = por %p183, %p184
      %p186 = scmp.ne.s32.totalorder %s178, %s181
      %p187 = scmp.eq.s32.totalorder %s16, 0
      %p188 = por %p186, %p187
      %p189 = scmp.ne.s32.totalorder %s178, %s181
      %p190 = scmp.eq.s32.totalorder %s21, 1
      %p191 = por %p189, %p190
      %p192 = scmp.ne.s32.totalorder %s181, %s182
      %p193 = scmp.eq.s32.totalorder %s21, 0
      %p194 = por %p192, %p193
      %p195 = scmp.ne.s32.totalorder %s181, %s182
      %p196 = scmp.eq.s32.totalorder %s22, 1
      %p197 = por %p195, %p196
      %p199 = scmp.ne.s32.totalorder %s182, %s198
      %p200 = scmp.eq.s32.totalorder %s22, 0
      %p201 = por %p199, %p200
      %p202 = scmp.le.s32.totalorder 1, %s16
      %p203 = scmp.lt.s32.totalorder %s16, 3
      %p204 = pnand %p202, %p203
      %p205 = pneg %p204
      // Predicated region
      $region9: #{tpu_custom_call.1} parent=5 // pred_check
        _
      $region10: #{tpu_custom_call.1} parent=5 // pred_check_branch
        %207 = sbr.rel (%p204) target = $region12
      $region11: #{tpu_custom_call.1} parent=5 // pred_region
        %s208 = ssub.s32 %s16, 1
        // Predicated region
        $region13: #{tpu_custom_call.1} parent=11 // pred_check
          %p209 = pneg %p63
        $region14: #{tpu_custom_call.1} parent=11 // pred_check_branch
          %211 = sbr.rel (%p209) target = $region16
        $region15: #{tpu_custom_call.1} parent=11 // pred_region
          _
        $region16: #{tpu_custom_call.1} parent=11 // pred_fallthru
          _
        // Predicated region
        $region17: #{tpu_custom_call.1} parent=11 // pred_check
          %p212 = pneg %p84
        $region18: #{tpu_custom_call.1} parent=11 // pred_check_branch
          %214 = sbr.rel (%p212) target = $region20
        $region19: #{tpu_custom_call.1} parent=11 // pred_region
          _
        $region20: #{tpu_custom_call.1} parent=11 // pred_fallthru
          _
        // Predicated region
        $region21: #{tpu_custom_call.1} parent=11 // pred_check
          %p215 = pneg %p105
        $region22: #{tpu_custom_call.1} parent=11 // pred_check_branch
          %217 = sbr.rel (%p215) target = $region24
        $region23: #{tpu_custom_call.1} parent=11 // pred_region
          _
        $region24: #{tpu_custom_call.1} parent=11 // pred_fallthru
          _
        // Predicated region
        $region25: #{tpu_custom_call.1} parent=11 // pred_check
          %p218 = pneg %p126
        $region26: #{tpu_custom_call.1} parent=11 // pred_check_branch
          %220 = sbr.rel (%p218) target = $region28
        $region27: #{tpu_custom_call.1} parent=11 // pred_region
          _
        $region28: #{tpu_custom_call.1} parent=11 // pred_fallthru
          _
        // Predicated region
        $region29: #{tpu_custom_call.1} parent=11 // pred_check
          %p221 = pneg %p147
        $region30: #{tpu_custom_call.1} parent=11 // pred_check_branch
          %223 = sbr.rel (%p221) target = $region32
        $region31: #{tpu_custom_call.1} parent=11 // pred_region
          _
        $region32: #{tpu_custom_call.1} parent=11 // pred_fallthru
          _
        // Predicated region
        $region33: #{tpu_custom_call.1} parent=11 // pred_check
          %p224 = pneg %p168
        $region34: #{tpu_custom_call.1} parent=11 // pred_check_branch
          %226 = sbr.rel (%p224) target = $region36
        $region35: #{tpu_custom_call.1} parent=11 // pred_region
          _
        $region36: #{tpu_custom_call.1} parent=11 // pred_fallthru
          _
      $region12: #{tpu_custom_call.1} parent=5 // pred_fallthru
        _
      %p227 = scmp.lt.s32.totalorder %s16, 2
      // Predicated region
      $region37: #{tpu_custom_call.1} parent=5 // pred_check
        %p228 = pneg %p227
      $region38: #{tpu_custom_call.1} parent=5 // pred_check_branch
        %230 = sbr.rel (%p228) target = $region40
      $region39: #{tpu_custom_call.1} parent=5 // pred_region
        // Predicated region
        $region41: #{tpu_custom_call.1} parent=39 // pred_check
          %p231 = pneg %p36
        $region42: #{tpu_custom_call.1} parent=39 // pred_check_branch
          %233 = sbr.rel (%p231) target = $region44
        $region43: #{tpu_custom_call.1} parent=39 // pred_region
          %p234 = scmp.lt.s32.totalorder %s16, 1
          %s235 = scalar_select %p234, %s16, 1
          %s236 = smul.addr %s235, 8
          %s237 = scalar_lea.vmem %s0, %s236
        $region44: #{tpu_custom_call.1} parent=39 // pred_fallthru
          _
      $region40: #{tpu_custom_call.1} parent=5 // pred_fallthru
        _
      %p238 = scmp.le.s32.totalorder 1, %s16
      %p239 = scmp.lt.s32.totalorder %s16, 3
      %p240 = pnand %p238, %p239
      %p241 = pneg %p240
      // Predicated region
      $region45: #{tpu_custom_call.1} parent=5 // pred_check
        _
      $region46: #{tpu_custom_call.1} parent=5 // pred_check_branch
        %243 = sbr.rel (%p240) target = $region48
      $region47: #{tpu_custom_call.1} parent=5 // pred_region
        %s244 = ssub.s32 %s16, 1
        %p245 = scmp.lt.s32.totalorder %s21, 1
        %s246 = scalar_select %p245, %s21, 1
        %s247 = smul.addr %s246, 8
        %s248 = scalar_lea.vmem %s0, %s247
        %p249 = pneg %p42
        %p250 = pneg %p39
        %p251 = pneg %p63
        %p252 = pneg %p60
        %p253 = pneg %p84
        %p254 = pneg %p81
        %p255 = pneg %p105
        %p256 = pneg %p102
        %p257 = pneg %p126
        %p258 = pneg %p123
        %p259 = pneg %p147
        %p260 = pneg %p144
        %p261 = pneg %p168
        %p262 = pneg %p165
        %p263 = pneg %p194
        %p264 = pneg %p191
        %s265 = sand.u32 %s181, 1
        %s266 = scalar_lea.sflag [#allocation4], %s265
        %s267 = sand.u32 %s181, 1
        %s268 = smul.addr %s267, 8
        %s269 = scalar_lea.vmem [#allocation3], %s268
        %p270 = scmp.lt.s32.totalorder %s21, 1
        %s271 = scalar_select %p270, %s21, 1
        %s272 = smul.addr %s271, 8
        %s273 = scalar_lea.vmem %s0, %s272
        %v275 = vld [vmem:[%s273] sm:$0xff]
        %v276 = vld [vmem:[%s1] sm:$0x1]
        %v277 = vld [vmem:[%s1 + $0x1] sm:$0x1]
        %v278 = vld [vmem:[%s1 + $0x2] sm:$0x1]
        %v279 = vld [vmem:[%s1 + $0x3] sm:$0x1]
        %v280 = vld [vmem:[%s1 + $0x4] sm:$0x1]
        %v281 = vld [vmem:[%s1 + $0x5] sm:$0x1]
        %vm282 = vcmask 261120
        %v283 = vsel %vm282, %v275, 0.0
        %284 = vadd.xlane.f32.xlu0 %v283
        %v285 = vpop.xlane.xlu0 %284
        %v286 = vrcp.pop 32.0
        %v287 = vmul.f32 32.0, %v286
        %v288 = vsub.f32 1.0, %v287
        %v289 = vmul.f32 %v286, %v288
        %v290 = vadd.f32 %v286, %v289
        %vm291 = vweird.f32 %v286
        %v292 = vsel %vm291, %v286, %v290
        %v293 = vmul.f32 %v285, %v292
        %v294 = vsub.f32 %v275, %v293
        %v295 = vmul.f32 %v294, %v294
        %v296 = vsel %vm282, %v295, 0.0
        %297 = vadd.xlane.f32.xlu0 %v296
        %v298 = vpop.xlane.xlu0 %297
        %v299 = vmul.f32 %v298, %v292
        %v300 = vadd.f32 %v299, 1e-05
        %v301 = vrsqrt.pop %v300
        %v302 = vmul.f32 %v301, %v300
        %v303 = vmul.f32 %v302, %v301
        %v304 = vmul.f32 0.5, %v303
        %v305 = vsub.f32 1.5, %v304
        %v306 = vmul.f32 %v301, %v305
        %vm307 = vweird.f32 %v300
        %vm308 = vweird.f32 %v301
        %vm309 = vmor %vm307, %vm308
        %v310 = vsel %vm309, %v301, %v306
        %v311 = vmul.f32 %v294, %v310
        %v312 = vperm.slane %v276, 0
        %v313 = vmul.f32 %v311, %v312
        %v314 = vperm.slane %v277, 0
        %v315 = vadd.f32 %v313, %v314
        %v316 = vpack.c.bf16 %v315, %v315
        %v317 = vld [vmem:[%s3] sm:$0xf]
        %v318 = vld [vmem:[%s3 + $0x4] sm:$0xf]
        %v319 = vld [vmem:[%s3 + $0x8] sm:$0xf]
        %v320 = vld [vmem:[%s3 + $0xc] sm:$0xf]
        %v325 = vunpack.c.l.b16 %v317
        %v326 = vunpack.c.l.b16 %v318
        %v327 = vunpack.c.l.b16 %v319
        %v328 = vunpack.c.l.b16 %v320
        %v329 = vpack.c.b16 %v326, %v325
        %v330 = vpack.c.b16 %v328, %v327
        %v334 = vsel %vm282, %v316, 0
        %336 = vmatpush.bf16.msra.mxu0 0
        %337 = vmatpush.bf16.msra.mxu0 0
        %338 = vmatpush.bf16.msra.mxu0 0
        %339 = vmatpush.bf16.msra.mxu0 0
        %340 = vmatpush.bf16.msra.mxu0 0
        %341 = vmatpush.bf16.msra.mxu0 0
        %342 = vmatpush.bf16.msra.mxu0 %v330
        %343 = vmatpush.bf16.msra.mxu0 %v329
        %344 = vmatmul.bf16.gmra.mxu0 %v334
        %v345 = vpop.f32.mrf.mxu0
        %v346 = vadd.f32 0.0, %v345
        %v347 = vpop.f32.mrf.mxu0
        %348 = vdwg.mxu0
        %v349 = vlaneseq
        %v350 = vshrl.u32 %v349, 7
        %v351 = vlaneseq
        %v352 = vand.u32 %v351, 127
        %vm353 = vcmp.ge.s32.totalorder %v350, %v352
        %v354 = vsel %vm353, 0.0, -1e+30
        %v355 = vpack.c.bf16 %v346, %v346
        %357 = vrot.lane.b32.xlu0 %v355, 96
        %v358 = vpop.permute.xlu0 %357
        %vm359 = vcmask 64512
        %v361 = vsel %vm359, %v355, 0
        %v364 = vsel %vm359, %v358, 0
        %366 = vmatpush.bf16.xpose.msra.mxu0 0
        %367 = vmatpush.bf16.xpose.msra.mxu0 0
        %368 = vmatpush.bf16.xpose.msra.mxu0 0
        %369 = vmatpush.bf16.xpose.msra.mxu0 0
        %370 = vmatpush.bf16.xpose.msra.mxu0 0
        %371 = vmatpush.bf16.xpose.msra.mxu0 0
        %372 = vmatpush.bf16.xpose.msra.mxu0 0
        %373 = vmatpush.bf16.xpose.msra.mxu0 %v364
        %374 = vmatmul.bf16.gmra.mxu0 %v361
        %v375 = vpop.f32.mrf.mxu0
        %v376 = vadd.f32 %v354, %v375
        %v377 = vpop.f32.mrf.mxu0
        %378 = vdwg.mxu0
        %v379 = vsel %vm359, %v376, -inf
        %380 = vmax.xlane.f32.xlu0 %v379
        %v381 = vpop.xlane.xlu0 %380
        %v382 = vsub.f32 %v376, %v381
        %v383 = vmul.f32 %v382, 1.442695
        %v384 = vpow.pop %v383
        %v385 = vsel %vm359, %v384, 0.0
        %386 = vadd.xlane.f32.xlu0 %v385
        %v387 = vpop.xlane.xlu0 %386
        %v388 = vrcp.pop %v387
        %v389 = vmul.f32 %v384, %v388
        %v390 = vpack.c.bf16 %v389, %v389
        %391 = vrot.lane.b32.xlu0 %v355, 64
        %v392 = vpop.permute.xlu0 %391
        %v394 = vsel %vm359, %v390, 0
        %vm396 = vcmask 1043456
        %v398 = vsel %vm396, %v392, 0
        %400 = vmatpush.bf16.msra.mxu0 0
        %401 = vmatpush.bf16.msra.mxu0 0
        %402 = vmatpush.bf16.msra.mxu0 0
        %403 = vmatpush.bf16.msra.mxu0 0
        %404 = vmatpush.bf16.msra.mxu0 0
        %405 = vmatpush.bf16.msra.mxu0 0
        %406 = vmatpush.bf16.msra.mxu0 0
        %407 = vmatpush.bf16.msra.mxu0 %v398
        %408 = vmatmul.bf16.gmra.mxu0 %v394
        %v409 = vpop.f32.mrf.mxu0
        %v410 = vadd.f32 0.0, %v409
        %v411 = vpop.f32.mrf.mxu0
        %412 = vdwg.mxu0
        %413 = vst.msk [vmem:[#allocation2] sm:$0xff] %vm359, %v410
        %414 = vrot.lane.b32.xlu0 %v355, 120
        %v415 = vpop.permute.xlu0 %414
        %416 = vrot.lane.b32.xlu0 %v355, 88
        %v417 = vpop.permute.xlu0 %416
        %v419 = vsel %vm359, %v415, 0
        %v422 = vsel %vm359, %v417, 0
        %424 = vmatpush.bf16.xpose.msra.mxu0 0
        %425 = vmatpush.bf16.xpose.msra.mxu0 0
        %426 = vmatpush.bf16.xpose.msra.mxu0 0
        %427 = vmatpush.bf16.xpose.msra.mxu0 0
        %428 = vmatpush.bf16.xpose.msra.mxu0 0
        %429 = vmatpush.bf16.xpose.msra.mxu0 0
        %430 = vmatpush.bf16.xpose.msra.mxu0 0
        %431 = vmatpush.bf16.xpose.msra.mxu0 %v422
        %432 = vmatmul.bf16.gmra.mxu0 %v419
        %v433 = vpop.f32.mrf.mxu0
        %v434 = vadd.f32 %v354, %v433
        %v435 = vpop.f32.mrf.mxu0
        %436 = vdwg.mxu0
        %v437 = vsel %vm359, %v434, -inf
        %438 = vmax.xlane.f32.xlu0 %v437
        %v439 = vpop.xlane.xlu0 %438
        %v440 = vsub.f32 %v434, %v439
        %v441 = vmul.f32 %v440, 1.442695
        %v442 = vpow.pop %v441
        %v443 = vsel %vm359, %v442, 0.0
        %444 = vadd.xlane.f32.xlu0 %v443
        %v445 = vpop.xlane.xlu0 %444
        %v446 = vrcp.pop %v445
        %v447 = vmul.f32 %v442, %v446
        %v448 = vpack.c.bf16 %v447, %v447
        %449 = vrot.lane.b32.xlu0 %v355, 56
        %v450 = vpop.permute.xlu0 %449
        %v452 = vsel %vm359, %v448, 0
        %v455 = vsel %vm396, %v450, 0
        %457 = vmatpush.bf16.msra.mxu0 0
        %458 = vmatpush.bf16.msra.mxu0 0
        %459 = vmatpush.bf16.msra.mxu0 0
        %460 = vmatpush.bf16.msra.mxu0 0
        %461 = vmatpush.bf16.msra.mxu0 0
        %462 = vmatpush.bf16.msra.mxu0 0
        %463 = vmatpush.bf16.msra.mxu0 0
        %464 = vmatpush.bf16.msra.mxu0 %v455
        %465 = vmatmul.bf16.gmra.mxu0 %v452
        %v466 = vpop.f32.mrf.mxu0
        %v467 = vadd.f32 0.0, %v466
        %v468 = vpop.f32.mrf.mxu0
        %469 = vdwg.mxu0
        %471 = vrot.lane.b32.xlu0 %v467, 8
        %v472 = vpop.permute.xlu0 %471
        %vm474 = vcmask 130112
        %475 = vst.msk [vmem:[#allocation2] sm:$0xff] %vm474, %v472
        %476 = vrot.lane.b32.xlu0 %v355, 112
        %v477 = vpop.permute.xlu0 %476
        %478 = vrot.lane.b32.xlu0 %v355, 80
        %v479 = vpop.permute.xlu0 %478
        %v481 = vsel %vm359, %v477, 0
        %v484 = vsel %vm359, %v479, 0
        %486 = vmatpush.bf16.xpose.msra.mxu0 0
        %487 = vmatpush.bf16.xpose.msra.mxu0 0
        %488 = vmatpush.bf16.xpose.msra.mxu0 0
        %489 = vmatpush.bf16.xpose.msra.mxu0 0
        %490 = vmatpush.bf16.xpose.msra.mxu0 0
        %491 = vmatpush.bf16.xpose.msra.mxu0 0
        %492 = vmatpush.bf16.xpose.msra.mxu0 0
        %493 = vmatpush.bf16.xpose.msra.mxu0 %v484
        %494 = vmatmul.bf16.gmra.mxu0 %v481
        %v495 = vpop.f32.mrf.mxu0
        %v496 = vadd.f32 %v354, %v495
        %v497 = vpop.f32.mrf.mxu0
        %498 = vdwg.mxu0
        %v499 = vsel %vm359, %v496, -inf
        %500 = vmax.xlane.f32.xlu0 %v499
        %v501 = vpop.xlane.xlu0 %500
        %v502 = vsub.f32 %v496, %v501
        %v503 = vmul.f32 %v502, 1.442695
        %v504 = vpow.pop %v503
        %v505 = vsel %vm359, %v504, 0.0
        %506 = vadd.xlane.f32.xlu0 %v505
        %v507 = vpop.xlane.xlu0 %506
        %v508 = vrcp.pop %v507
        %v509 = vmul.f32 %v504, %v508
        %v510 = vpack.c.bf16 %v509, %v509
        %511 = vrot.lane.b32.xlu0 %v355, 48
        %v512 = vpop.permute.xlu0 %511
        %v514 = vsel %vm359, %v510, 0
        %v517 = vsel %vm396, %v512, 0
        %519 = vmatpush.bf16.msra.mxu0 0
        %520 = vmatpush.bf16.msra.mxu0 0
        %521 = vmatpush.bf16.msra.mxu0 0
        %522 = vmatpush.bf16.msra.mxu0 0
        %523 = vmatpush.bf16.msra.mxu0 0
        %524 = vmatpush.bf16.msra.mxu0 0
        %525 = vmatpush.bf16.msra.mxu0 0
        %526 = vmatpush.bf16.msra.mxu0 %v517
        %527 = vmatmul.bf16.gmra.mxu0 %v514
        %v528 = vpop.f32.mrf.mxu0
        %v529 = vadd.f32 0.0, %v528
        %v530 = vpop.f32.mrf.mxu0
        %531 = vdwg.mxu0
        %533 = vrot.lane.b32.xlu0 %v529, 16
        %v534 = vpop.permute.xlu0 %533
        %vm536 = vcmask 195712
        %537 = vst.msk [vmem:[#allocation2] sm:$0xff] %vm536, %v534
        %538 = vrot.lane.b32.xlu0 %v355, 104
        %v539 = vpop.permute.xlu0 %538
        %540 = vrot.lane.b32.xlu0 %v355, 72
        %v541 = vpop.permute.xlu0 %540
        %v543 = vsel %vm359, %v539, 0
        %v546 = vsel %vm359, %v541, 0
        %548 = vmatpush.bf16.xpose.msra.mxu0 0
        %549 = vmatpush.bf16.xpose.msra.mxu0 0
        %550 = vmatpush.bf16.xpose.msra.mxu0 0
        %551 = vmatpush.bf16.xpose.msra.mxu0 0
        %552 = vmatpush.bf16.xpose.msra.mxu0 0
        %553 = vmatpush.bf16.xpose.msra.mxu0 0
        %554 = vmatpush.bf16.xpose.msra.mxu0 0
        %555 = vmatpush.bf16.xpose.msra.mxu0 %v546
        %556 = vmatmul.bf16.gmra.mxu0 %v543
        %v557 = vpop.f32.mrf.mxu0
        %v558 = vadd.f32 %v354, %v557
        %v559 = vpop.f32.mrf.mxu0
        %560 = vdwg.mxu0
        %v561 = vsel %vm359, %v558, -inf
        %562 = vmax.xlane.f32.xlu0 %v561
        %v563 = vpop.xlane.xlu0 %562
        %v564 = vsub.f32 %v558, %v563
        %v565 = vmul.f32 %v564, 1.442695
        %v566 = vpow.pop %v565
        %v567 = vsel %vm359, %v566, 0.0
        %568 = vadd.xlane.f32.xlu0 %v567
        %v569 = vpop.xlane.xlu0 %568
        %v570 = vrcp.pop %v569
        %v571 = vmul.f32 %v566, %v570
        %v572 = vpack.c.bf16 %v571, %v571
        %573 = vrot.lane.b32.xlu0 %v355, 40
        %v574 = vpop.permute.xlu0 %573
        %v576 = vsel %vm359, %v572, 0
        %v579 = vsel %vm396, %v574, 0
        %581 = vmatpush.bf16.msra.mxu0 0
        %582 = vmatpush.bf16.msra.mxu0 0
        %583 = vmatpush.bf16.msra.mxu0 0
        %584 = vmatpush.bf16.msra.mxu0 0
        %585 = vmatpush.bf16.msra.mxu0 0
        %586 = vmatpush.bf16.msra.mxu0 0
        %587 = vmatpush.bf16.msra.mxu0 0
        %588 = vmatpush.bf16.msra.mxu0 %v579
        %589 = vmatmul.bf16.gmra.mxu0 %v576
        %v590 = vpop.f32.mrf.mxu0
        %v591 = vadd.f32 0.0, %v590
        %v592 = vpop.f32.mrf.mxu0
        %593 = vdwg.mxu0
        %595 = vrot.lane.b32.xlu0 %v591, 24
        %v596 = vpop.permute.xlu0 %595
        %vm598 = vcmask 261312
        %599 = vst.msk [vmem:[#allocation2] sm:$0xff] %vm598, %v596
        %v600 = vld [vmem:[#allocation2] sm:$0xff]
        %v601 = vpack.c.bf16 %v600, %v600
        %v602 = vld [vmem:[%s4] sm:$0xf]
        %v603 = vld [vmem:[%s4 + $0x4] sm:$0xf]
        %v604 = vld [vmem:[%s4 + $0x8] sm:$0xf]
        %v605 = vld [vmem:[%s4 + $0xc] sm:$0xf]
        %v606 = vperm.slane %v278, 0
        %v611 = vunpack.c.l.b16 %v602
        %v612 = vunpack.c.l.b16 %v603
        %v613 = vunpack.c.l.b16 %v604
        %v614 = vunpack.c.l.b16 %v605
        %v615 = vpack.c.b16 %v612, %v611
        %v616 = vpack.c.b16 %v614, %v613
        %v620 = vsel %vm282, %v601, 0
        %622 = vmatpush.bf16.msra.mxu0 0
        %623 = vmatpush.bf16.msra.mxu0 0
        %624 = vmatpush.bf16.msra.mxu0 0
        %625 = vmatpush.bf16.msra.mxu0 0
        %626 = vmatpush.bf16.msra.mxu0 0
        %627 = vmatpush.bf16.msra.mxu0 0
        %628 = vmatpush.bf16.msra.mxu0 %v616
        %629 = vmatpush.bf16.msra.mxu0 %v615
        %630 = vmatmul.bf16.gmra.mxu0 %v620
        %v631 = vpop.f32.mrf.mxu0
        %v632 = vadd.f32 %v606, %v631
        %v633 = vpop.f32.mrf.mxu0
        %634 = vdwg.mxu0
        %v635 = vadd.f32 %v632, %v275
        %v636 = vsel %vm282, %v635, 0.0
        %637 = vadd.xlane.f32.xlu0 %v636
        %v638 = vpop.xlane.xlu0 %637
        %v639 = vmul.f32 %v638, %v292
        %v640 = vsub.f32 %v635, %v639
        %v641 = vmul.f32 %v640, %v640
        %v642 = vsel %vm282, %v641, 0.0
        %643 = vadd.xlane.f32.xlu0 %v642
        %v644 = vpop.xlane.xlu0 %643
        %v645 = vmul.f32 %v644, %v292
        %v646 = vadd.f32 %v645, 1e-05
        %v647 = vrsqrt.pop %v646
        %v648 = vmul.f32 %v647, %v646
        %v649 = vmul.f32 %v648, %v647
        %v650 = vmul.f32 0.5, %v649
        %v651 = vsub.f32 1.5, %v650
        %v652 = vmul.f32 %v647, %v651
        %vm653 = vweird.f32 %v646
        %vm654 = vweird.f32 %v647
        %vm655 = vmor %vm653, %vm654
        %v656 = vsel %vm655, %v647, %v652
        %v657 = vmul.f32 %v640, %v656
        %v658 = vperm.slane %v279, 0
        %v659 = vmul.f32 %v657, %v658
        %v660 = vperm.slane %v280, 0
        %v661 = vadd.f32 %v659, %v660
        %v662 = vpack.c.bf16 %v661, %v661
        %v663 = vld [vmem:[%s5] sm:$0xf]
        %v664 = vld [vmem:[%s5 + $0x4] sm:$0xf]
        %v665 = vld [vmem:[%s5 + $0x8] sm:$0xf]
        %v666 = vld [vmem:[%s5 + $0xc] sm:$0xf]
        %v667 = vld [vmem:[%s2] sm:$0x1]
        %v669 = vperm.slane %v667, 0
        %v675 = vunpack.c.l.b16 %v663
        %v676 = vunpack.c.l.b16 %v664
        %v677 = vunpack.c.l.b16 %v665
        %v678 = vunpack.c.l.b16 %v666
        %v679 = vpack.c.b16 %v676, %v675
        %v680 = vpack.c.b16 %v678, %v677
        %v684 = vsel %vm282, %v662, 0
        %686 = vmatpush.bf16.msra.mxu0 0
        %687 = vmatpush.bf16.msra.mxu0 0
        %688 = vmatpush.bf16.msra.mxu0 0
        %689 = vmatpush.bf16.msra.mxu0 0
        %690 = vmatpush.bf16.msra.mxu0 0
        %691 = vmatpush.bf16.msra.mxu0 0
        %692 = vmatpush.bf16.msra.mxu0 %v680
        %693 = vmatpush.bf16.msra.mxu0 %v679
        %694 = vmatmul.bf16.gmra.mxu0 %v684
        %v695 = vpop.f32.mrf.mxu0
        %v696 = vadd.f32 %v669, %v695
        %v697 = vpop.f32.mrf.mxu0
        %698 = vdwg.mxu0
        %v699 = vmax.f32 %v696, 0.0
        %v700 = vpack.c.bf16 %v699, %v699
        %v701 = vld [vmem:[%s6] sm:$0xf]
        %v702 = vld [vmem:[%s6 + $0x4] sm:$0xf]
        %v703 = vld [vmem:[%s6 + $0x8] sm:$0xf]
        %v704 = vld [vmem:[%s6 + $0xc] sm:$0xf]
        %v705 = vld [vmem:[%s6 + $0x10] sm:$0xf]
        %v706 = vld [vmem:[%s6 + $0x14] sm:$0xf]
        %v707 = vld [vmem:[%s6 + $0x18] sm:$0xf]
        %v708 = vld [vmem:[%s6 + $0x1c] sm:$0xf]
        %v709 = vld [vmem:[%s6 + $0x20] sm:$0xf]
        %v710 = vld [vmem:[%s6 + $0x24] sm:$0xf]
        %v711 = vld [vmem:[%s6 + $0x28] sm:$0xf]
        %v712 = vld [vmem:[%s6 + $0x2c] sm:$0xf]
        %v713 = vld [vmem:[%s6 + $0x30] sm:$0xf]
        %v714 = vld [vmem:[%s6 + $0x34] sm:$0xf]
        %v715 = vld [vmem:[%s6 + $0x38] sm:$0xf]
        %v716 = vld [vmem:[%s6 + $0x3c] sm:$0xf]
        %v717 = vperm.slane %v281, 0
        %v734 = vunpack.c.l.b16 %v701
        %v735 = vunpack.c.l.b16 %v702
        %v736 = vunpack.c.l.b16 %v703
        %v737 = vunpack.c.l.b16 %v704
        %v738 = vunpack.c.l.b16 %v705
        %v739 = vunpack.c.l.b16 %v706
        %v740 = vunpack.c.l.b16 %v707
        %v741 = vunpack.c.l.b16 %v708
        %v742 = vunpack.c.l.b16 %v709
        %v743 = vunpack.c.l.b16 %v710
        %v744 = vunpack.c.l.b16 %v711
        %v745 = vunpack.c.l.b16 %v712
        %v746 = vunpack.c.l.b16 %v713
        %v747 = vunpack.c.l.b16 %v714
        %v748 = vunpack.c.l.b16 %v715
        %v749 = vunpack.c.l.b16 %v716
        %v750 = vpack.c.b16 %v735, %v734
        %v751 = vpack.c.b16 %v737, %v736
        %v752 = vpack.c.b16 %v739, %v738
        %v753 = vpack.c.b16 %v741, %v740
        %v754 = vpack.c.b16 %v743, %v742
        %v755 = vpack.c.b16 %v745, %v744
        %v756 = vpack.c.b16 %v747, %v746
        %v757 = vpack.c.b16 %v749, %v748
        %766 = vmatpush.bf16.msra.mxu0 %v757
        %767 = vmatpush.bf16.msra.mxu0 %v756
        %768 = vmatpush.bf16.msra.mxu0 %v755
        %769 = vmatpush.bf16.msra.mxu0 %v754
        %770 = vmatpush.bf16.msra.mxu0 %v753
        %771 = vmatpush.bf16.msra.mxu0 %v752
        %772 = vmatpush.bf16.msra.mxu0 %v751
        %773 = vmatpush.bf16.msra.mxu0 %v750
        %774 = vmatmul.bf16.gmra.mxu0 %v700
        %v775 = vpop.f32.mrf.mxu0
        %v776 = vadd.f32 %v717, %v775
        %v777 = vpop.f32.mrf.mxu0
        %778 = vdwg.mxu0
        %v779 = vadd.f32 %v776, %v275
        %780 = vst.msk [vmem:[%s269] sm:$0xff] %vm282, %v779
        %s781 = sand.u32 %s181, 1
        %s782 = scalar_lea.sflag [#allocation4], %s781
        %s783 = sand.u32 %s181, 1
        %s784 = smul.addr %s783, 8
        %s785 = scalar_lea.vmem [#allocation3], %s784
        // Predicated region
        $region49: #{tpu_custom_call.1} parent=47 // pred_check
          %p786 = pneg %p191
        $region50: #{tpu_custom_call.1} parent=47 // pred_check_branch
          %788 = sbr.rel (%p786) target = $region52
        $region51: #{tpu_custom_call.1} parent=47 // pred_region
          %790 = vsyncadd %s782, 0
          %s791 = smul.addr %s21, 8
          %s792 = scalar_lea.hbm %s7, %s791
          %s794 = sshll.u32 %s785, 4
          %s795 = int_to_ptr.vmem [resolvable:$true] %s794
          %s796 = sshll.u32 %s792, 4
          %s797 = int_to_ptr.hbm [resolvable:$true] %s796
          %799 = dma.vmem_to_hbm [thread:$0]  %s795, 128, %s797, %s782
        $region52: #{tpu_custom_call.1} parent=47 // pred_fallthru
          _
      $region48: #{tpu_custom_call.1} parent=5 // pred_fallthru
        _
      %p800 = scmp.le.s32.totalorder 2, %s16
      // Predicated region
      $region53: #{tpu_custom_call.1} parent=5 // pred_check
        %p801 = pneg %p800
      $region54: #{tpu_custom_call.1} parent=5 // pred_check_branch
        %803 = sbr.rel (%p801) target = $region56
      $region55: #{tpu_custom_call.1} parent=5 // pred_region
        %s804 = ssub.s32 %s16, 2
        // Predicated region
        $region57: #{tpu_custom_call.1} parent=55 // pred_check
          %p805 = pneg %p197
        $region58: #{tpu_custom_call.1} parent=55 // pred_check_branch
          %807 = sbr.rel (%p805) target = $region60
        $region59: #{tpu_custom_call.1} parent=55 // pred_region
          %s808 = sand.u32 %s182, 1
          %s809 = scalar_lea.sflag [#allocation4], %s808
          %s810 = sand.u32 %s182, 1
          %s811 = smul.addr %s810, 8
          %s812 = scalar_lea.vmem [#allocation3], %s811
          %814 = dma.done %s809, 128
        $region60: #{tpu_custom_call.1} parent=55 // pred_fallthru
          _
      $region56: #{tpu_custom_call.1} parent=5 // pred_fallthru
        _
    $region6: #{tpu_custom_call.1} parent=1 // loop_footer
      %s20 = sadd.s32 1, %s16
    $region7: #{tpu_custom_call.1} parent=1 // loop_footer_branch
      %15 = sbr.rel target = $region3
    $region8: #{tpu_custom_call.1} parent=1 // loop_exit
      _
    %815 = vsyncpa [#allocation4], 1
    %s816 = scalar_lea.sflag [#allocation4], 1
    %817 = vsyncpa %s816, 1

</llo_original>
